<compile_context>
chip_gen: v7x
topology: tpu7x:2x2x1
jax: 0.10.0
libtpu: 0.0.40
codegen_flags: <defaults>
</compile_context>

<pallas_src>
import functools
from collections import Counter

import jax
import jax.numpy as jnp
import numpy as np
from jax.experimental import pallas as pl
from jax.experimental.pallas import tpu as pltpu

_INV5 = 0.2  # 1/5 as a multiply (cheaper than a divide on the VPU)


# --------------------------------------------------------------------------- #
# Kernels
# --------------------------------------------------------------------------- #
def _lane_roll_kernel(x_ref, o_ref, *, shifts, base_coeff, acc_dtype):
    """Sum of circular lane rolls over the full lane extent (XLU rotates)."""
    x = x_ref[...].astype(acc_dtype)
    acc = x * float(base_coeff) if base_coeff != 1 else x
    for s, c in shifts:                       # 0 < s < lanes, static
        r = pltpu.roll(x, s, axis=1)          # XLU lane rotate (free slot)
        acc = acc + (r * float(c) if c != 1 else r)
    o_ref[...] = (acc * _INV5).astype(o_ref.dtype)


def _block_roll_kernel(x_ref, w_ref, o_ref, *, block, shifts, base_coeff,
                       acc_dtype):
    """Blockwise circular roll along the lane axis (block divides lanes).

    A roll by s *inside* each block equals a whole-row roll by s everywhere
    except the first s columns of each block, which must instead come from a
    whole-row roll by s - block; a per-lane select (driven by a single
    (1, lanes) position row, broadcast by jnp.where) stitches the two.
    """
    x = x_ref[...].astype(acc_dtype)
    lanes = x.shape[1]
    wrow = w_ref[...]                         # (1, lanes) int32: lane % block
    acc = x * float(base_coeff) if base_coeff != 1 else x
    for s, c in shifts:                       # 0 < s < block, static
        main = pltpu.roll(x, s, axis=1)                    # XLU rotate
        corr = pltpu.roll(x, (s - block) % lanes, axis=1)  # XLU rotate
        term = jnp.where(wrow >= s, main, corr)            # (1,lanes) mask bcast
        acc = acc + (term * float(c) if c != 1 else term)
    o_ref[...] = (acc * _INV5).astype(o_ref.dtype)


# --------------------------------------------------------------------------- #
# Wrapper helpers
# --------------------------------------------------------------------------- #
def _grouped_shifts(n):
    """Group torch shifts (+1,-1,+2,-2) mod n; zero-shifts fold into identity."""
    cnt = Counter(t % n for t in (1, -1, 2, -2))
    base = 1 + cnt.pop(0, 0)
    return base, tuple(sorted(cnt.items()))


def _sublane_multiple(dtype):
    """Dtype-dependent sublane packing multiple: 8 f32, 16 bf16, 32 int8."""
    return max(8, 32 // np.dtype(dtype).itemsize)


def _chip_defaults():
    """(default block_bytes, vmem_limit cap, min grid tiles) per generation."""
    kind = ""
    try:
        kind = jax.devices()[0].device_kind.lower()
    except Exception:
        pass
    if "v6" in kind:                       # v6e: 32 MiB default scoped VMEM
        return 4 << 20, 100 << 20, 1
    if any(k in kind for k in ("v5", "v4", "v3", "v2")):
        return 2 << 20, 100 << 20, 1       # v5e: 16 MiB default scoped VMEM
    if "7" in kind:                        # v7x: 64 MiB physical, 2 TCs
        return 8 << 20, 56 << 20, 2
    return 2 << 20, 56 << 20, 1            # unknown: conservative


def _pick_tile_m(rows, row_bytes, block_bytes, sub, min_grid):
    """Largest sublane-aligned row tile ~block_bytes; >=min_grid tiles if possible."""
    t = block_bytes // max(row_bytes, 1)
    t = (t // sub) * sub
    t = max(t, sub)
    if t >= rows:
        t = rows
    if min_grid > 1 and rows >= min_grid * sub:
        max_tile = -(-rows // min_grid)              # ceil(rows / min_grid)
        max_tile = -(-max_tile // sub) * sub          # round up to sublane mult
        t = min(t, max_tile)                          # => grid_m >= min_grid
    return int(t)


def _choose_fold(pre, l0, elem_bytes, lane_target=1024, max_row_bytes=256 * 1024):
    """Divisor G of `pre` making G*l0 lanes wide, preferring multiples of 128."""
    divs = set()
    d = 1
    while d * d <= pre:
        if pre % d == 0:
            divs.add(d)
            divs.add(pre // d)
        d += 1
    divs = sorted(divs)
    max_g = max(max_row_bytes // (l0 * elem_bytes), 1)
    cand = [g for g in divs if g <= max_g]
    if not cand:
        return 1
    aligned = [g for g in cand if (g * l0) % 128 == 0]   # lane-dense stores
    pool = aligned if aligned else cand
    good = [g for g in pool if g * l0 >= lane_target]
    return good[0] if good else pool[-1]


# --------------------------------------------------------------------------- #
# Public entry point
# --------------------------------------------------------------------------- #
def shift2(x, dim, *, block_bytes=None, in_place=False):
    """Pallas TPU implementation of BHViT Shift2.forward(x, dim). `dim` static.

    in_place=True adds input_output_aliases={0: 0}; only use it when the
    caller donates x (otherwise XLA inserts a defensive copy).
    """
    dim = dim % x.ndim
    n = x.shape[dim]
    pre = int(np.prod(x.shape[:dim], dtype=np.int64))
    post = int(np.prod(x.shape[dim + 1:], dtype=np.int64))
    l0 = n * post                              # roll axis (+ trailing) on lanes
    elem_bytes = np.dtype(x.dtype).itemsize
    base, terms = _grouped_shifts(n)
    flat_shifts = tuple((s * post, c) for s, c in terms)

    default_blk, vmem_cap, min_grid = _chip_defaults()
    if block_bytes is None:
        block_bytes = default_blk
    sub = _sublane_multiple(x.dtype)

    # Accumulate sub-32-bit floats in f32 (free: kernel is memory-bound).
    acc_dtype = x.dtype
    if jnp.issubdtype(np.dtype(x.dtype), jnp.floating) and elem_bytes < 4:
        acc_dtype = jnp.float32

    # Fold part of the leading axis onto lanes when the natural lane extent is
    # narrow (typical BHViT case: rolling W = 7..56 of NCHW).
    fold = 1
    if l0 < 128 and pre > 1 and terms:
        fold = _choose_fold(pre, l0, elem_bytes)

    rows, lanes = pre // fold, fold * l0
    x2 = x.reshape(rows, lanes)
    tile_m = _pick_tile_m(rows, lanes * elem_bytes, block_bytes, sub, min_grid)
    grid_m = -(-rows // tile_m)

    # VMEM budget: double-buffered input + output tiles, plus headroom.
    tile_bytes = tile_m * lanes * elem_bytes
    vmem_limit = int(min(max(4 * tile_bytes + (4 << 20), 16 << 20), vmem_cap))

    compiler_params = pltpu.CompilerParams(
        dimension_semantics=("parallel",), vmem_limit_bytes=vmem_limit)
    cost = pl.CostEstimate(flops=int(6 * x.size), transcendentals=0,
                           bytes_accessed=int(2 * x.size * elem_bytes))
    aliases = {0: 0} if in_place else {}

    if fold > 1:
        # Single (1, lanes) int32 row of lane positions modulo the roll block.
        wpos = jnp.asarray(
            (np.arange(lanes, dtype=np.int32) % l0).reshape(1, lanes))
        kernel = functools.partial(
            _block_roll_kernel, block=l0, shifts=flat_shifts,
            base_coeff=base, acc_dtype=acc_dtype)
        out = pl.pallas_call(
            kernel,
            out_shape=jax.ShapeDtypeStruct((rows, lanes), x.dtype),
            grid=(grid_m,),
            in_specs=[pl.BlockSpec((tile_m, lanes), lambda i: (i, 0)),
                      pl.BlockSpec((1, lanes), lambda i: (0, 0))],
            out_specs=pl.BlockSpec((tile_m, lanes), lambda i: (i, 0)),
            compiler_params=compiler_params,
            cost_estimate=cost,
            input_output_aliases=aliases,
        )(x2, wpos)
    else:
        kernel = functools.partial(
            _lane_roll_kernel, shifts=flat_shifts, base_coeff=base,
            acc_dtype=acc_dtype)
        out = pl.pallas_call(
            kernel,
            out_shape=jax.ShapeDtypeStruct((rows, lanes), x.dtype),
            grid=(grid_m,),
            in_specs=[pl.BlockSpec((tile_m, lanes), lambda i: (i, 0))],
            out_specs=pl.BlockSpec((tile_m, lanes), lambda i: (i, 0)),
            compiler_params=compiler_params,
            cost_estimate=cost,
            input_output_aliases=aliases,
        )(x2)

    return out.reshape(x.shape)


def shift2_ref(x, dim):
    """Pure-JAX reference matching torch semantics exactly."""
    return (x
            + jnp.roll(x, 1, axis=dim)
            + jnp.roll(x, -1, axis=dim)
            + jnp.roll(x, 2, axis=dim)
            + jnp.roll(x, -2, axis=dim)) / 5.0


# --------------------------------------------------------------------------- #
# Self-test
# --------------------------------------------------------------------------- #
if __name__ == "__main__":
    root = jax.random.PRNGKey(0)
    cases = [
        # (shape NCHW, roll dims, block_bytes, dtype, rtol, atol)
        ((2, 4, 16, 16), (1, 2, 3), None, jnp.float32, 1e-5, 1e-5),
        ((1, 3, 14, 14), (2, 3), None, jnp.float32, 1e-5, 1e-5),        # BHViT-like
        ((5, 8, 32, 32), (2, 3), 64 * 1024, jnp.float32, 1e-5, 1e-5),   # multi-block
        ((2, 8, 16, 16), (2, 3), None, jnp.bfloat16, 2e-2, 2e-2),       # f32 accumulate
    ]

    ok = True
    for idx, (shape, dims, blk, dtype, rtol, atol) in enumerate(cases):
        key = jax.random.fold_in(root, idx)
        x = jax.random.normal(key, shape, dtype=jnp.float32).astype(dtype)
        ref_in = np.asarray(x, dtype=np.float32)
        for dim in dims:
            out = jax.block_until_ready(shift2(x, dim, block_bytes=blk))
            ref = np.asarray(shift2_ref(jnp.asarray(ref_in), dim))
            got = np.asarray(out, dtype=np.float32)
            if not np.allclose(got, ref, rtol=rtol, atol=atol):
                ok = False
                err = float(np.max(np.abs(got - ref)))
                print(f"MISMATCH shape={shape} dtype={np.dtype(dtype).name} "
                      f"dim={dim} max_abs_err={err}")

    if ok:
        print("KERNEL_OK")
</pallas_src>

<mosaic_0001>
module attributes {stable_mosaic.version = 11 : i64} {
  func.func @_lane_roll_kernel(%arg0: i32, %arg1: memref<2x1024xf32, #tpu.memory_space<vmem>>, %arg2: memref<2x1024xf32, #tpu.memory_space<vmem>>) attributes {dimension_semantics = [#tpu.dimension_semantics<parallel>], iteration_bounds = array<i64: 1>, scalar_prefetch = 0 : i64, scratch_operands = 0 : i64, tpu.core_type = #tpu.core_type<tc>, window_params = [{transform_indices = @transform_0, window_bounds = array<i64: 2, 1024>}, {transform_indices = @transform_1, window_bounds = array<i64: 2, 1024>}]} {
    %c0 = arith.constant 0 : index
    %c0_0 = arith.constant 0 : index
    %0 = vector.load %arg1[%c0, %c0_0] : memref<2x1024xf32, #tpu.memory_space<vmem>>, vector<2x1024xf32>
    %c256_i32 = arith.constant 256 : i32
    %1 = tpu.dynamic_rotate %0 by %c256_i32 dim 1 : vector<2x1024xf32>, i32 -> vector<2x1024xf32>
    %2 = arith.addf %0, %1 : vector<2x1024xf32>
    %c512_i32 = arith.constant 512 : i32
    %3 = tpu.dynamic_rotate %0 by %c512_i32 dim 1 : vector<2x1024xf32>, i32 -> vector<2x1024xf32>
    %cst = arith.constant 2.000000e+00 : f32
    %4 = vector.broadcast %cst : f32 to vector<2x1024xf32>
    %5 = arith.mulf %3, %4 : vector<2x1024xf32>
    %6 = arith.addf %2, %5 : vector<2x1024xf32>
    %c768_i32 = arith.constant 768 : i32
    %7 = tpu.dynamic_rotate %0 by %c768_i32 dim 1 : vector<2x1024xf32>, i32 -> vector<2x1024xf32>
    %8 = arith.addf %6, %7 : vector<2x1024xf32>
    %cst_1 = arith.constant 2.000000e-01 : f32
    %9 = vector.broadcast %cst_1 : f32 to vector<2x1024xf32>
    %10 = arith.mulf %8, %9 : vector<2x1024xf32>
    %c0_2 = arith.constant 0 : index
    %c0_3 = arith.constant 0 : index
    %11 = vector.load %arg2[%c0_2, %c0_3] : memref<2x1024xf32, #tpu.memory_space<vmem>>, vector<2x1024xf32>
    tpu.vector_store %arg2[%c0_2, %c0_3], %10 {strides = array<i32>} : memref<2x1024xf32, #tpu.memory_space<vmem>>, vector<2x1024xf32>,
    return
  }
  func.func @transform_0(%arg0: i32) -> (i32, i32) {
    %c0_i32 = arith.constant 0 : i32
    %c0_i32_0 = arith.constant 0 : i32
    return %arg0, %c0_i32 : i32, i32
  }
  func.func @transform_1(%arg0: i32) -> (i32, i32) {
    %c0_i32 = arith.constant 0 : i32
    %c0_i32_0 = arith.constant 0 : i32
    return %arg0, %c0_i32 : i32, i32
  }
}

</mosaic_0001>

<llo_original>
// kernel: tpu_custom_call.1
$region0: #{tpu_custom_call.1}
  #allocation0 [shape = 'u32[]', space=smem, size = 0x4, offset = 0x4, fixed_abs, tag = 'smem constant byte address 0x4 - core index']
  #allocation1 [shape = 'u32[144,128]{1,0:T(1,128)}', space=vmem, size = 0x12000, scoped, tag = 'internal scratch']
  %s0 = inlined_call_operand.hbm [shape: f32[2,1024], index: 0, kind: input, shape index: {}]
  %s1 = inlined_call_operand.hbm [shape: f32[2,1024], index: 1, kind: output, shape index: {}]
  %s2 = sld [smem:[#allocation0]]
  $region18: #{tpu_custom_call.1} parent=0
    _
  %s4 = ssub.s32 1, %s2
  %s5 = scalar_select 0, %s4, %s2
  $region1: #{tpu_custom_call.1} parent=0
    #allocation2 [shape = 'u8[8192]{0}', space=vmem, size = 0x2000, scoped, tag = 'input window, operand 0, single buffered']
    #allocation3 [shape = 's32[1]{0}', space=sflag, size = 0x4, scoped, tag = 'scoped memory for tpu_custom_call.1']
    #allocation4 [shape = 's32[1]{0}', space=sflag, size = 0x4, scoped, tag = 'scoped memory for tpu_custom_call.1']
    #allocation5 [shape = 'u8[8192]{0}', space=vmem, size = 0x2000, scoped, tag = 'output window, operand 0, single buffered']
    %6 = vsyncpa [#allocation3], 0
    %7 = vsyncpa [#allocation4], 0
    // Predicated region
    $region2: #{tpu_custom_call.1} parent=1 // pred_check
      _
    $region3: #{tpu_custom_call.1} parent=1 // pred_check_branch
      %9 = sbr.rel (0) target = $region5
    $region4: #{tpu_custom_call.1} parent=1 // pred_region
      %s11 = ssub.s32 256, 256
      %12 = vsyncadd [#allocation3], %s11
      %s14 = sshll.u32 [#allocation2], 4
      %s15 = int_to_ptr.vmem [resolvable:$true] %s14
      %17 = dma.hbm_to_vmem [thread:$0]  %s0, 256, %s15, [#allocation3]
    $region5: #{tpu_custom_call.1} parent=1 // pred_fallthru
      _
    // Predicated region
    $region6: #{tpu_custom_call.1} parent=1 // pred_check
      _
    $region7: #{tpu_custom_call.1} parent=1 // pred_check_branch
      %19 = sbr.rel (0) target = $region9
    $region8: #{tpu_custom_call.1} parent=1 // pred_region
      %20 = dma.done [#allocation3], 256
    $region9: #{tpu_custom_call.1} parent=1 // pred_fallthru
      _
    %v21 = vld [vmem:[#allocation2] sm:$0xff]
    %v22 = vld [vmem:[#allocation2 + $0x8] sm:$0xff]
    %v25 = vcombine.high %v21, %v21
    %v27 = vunpack.c.l.s4 1983009808
    %v28 = vunpack.c.0.s8 %v27
    %v29 = vlaneseq
    %v30 = vshrl.u32 %v29, 7
    %v31 = vsub.s32 %v28, %v30
    %v32 = vrot.slane %v21, %v31
    %v34 = vunpack.c.l.s4 1983009808
    %v35 = vunpack.c.0.s8 %v34
    %v36 = vlaneseq
    %v37 = vshrl.u32 %v36, 7
    %v38 = vsub.s32 %v35, %v37
    %v39 = vrot.slane %v25, %v38
    %v40 = vcombine.high %v32, %v32
    %v41 = vcombine.high %v39, %v39
    %v42 = vcombine.high %v22, %v22
    %v44 = vunpack.c.l.s4 1983009808
    %v45 = vunpack.c.0.s8 %v44
    %v46 = vlaneseq
    %v47 = vshrl.u32 %v46, 7
    %v48 = vsub.s32 %v45, %v47
    %v49 = vrot.slane %v22, %v48
    %v51 = vunpack.c.l.s4 1983009808
    %v52 = vunpack.c.0.s8 %v51
    %v53 = vlaneseq
    %v54 = vshrl.u32 %v53, 7
    %v55 = vsub.s32 %v52, %v54
    %v56 = vrot.slane %v42, %v55
    %v57 = vcombine.high %v49, %v49
    %v58 = vcombine.high %v56, %v56
    %v59 = vcombine.low %v56, %v58
    %v60 = vcombine.low %v32, %v40
    %v62 = vunpack.c.l.s4 1983009808
    %v63 = vunpack.c.0.s8 %v62
    %v64 = vlaneseq
    %v65 = vshrl.u32 %v64, 7
    %v66 = vsub.s32 %v63, %v65
    %v67 = vrot.slane %v59, %v66
    %v69 = vunpack.c.l.s4 1983009808
    %v70 = vunpack.c.0.s8 %v69
    %v71 = vlaneseq
    %v72 = vshrl.u32 %v71, 7
    %v73 = vsub.s32 %v70, %v72
    %v74 = vrot.slane %v60, %v73
    %v75 = vcombine.low %v67, %v74
    %v76 = vcombine.low %v39, %v41
    %v77 = vcombine.low %v49, %v57
    %v79 = vunpack.c.l.s4 1983009808
    %v80 = vunpack.c.0.s8 %v79
    %v81 = vlaneseq
    %v82 = vshrl.u32 %v81, 7
    %v83 = vsub.s32 %v80, %v82
    %v84 = vrot.slane %v76, %v83
    %v86 = vunpack.c.l.s4 1983009808
    %v87 = vunpack.c.0.s8 %v86
    %v88 = vlaneseq
    %v89 = vshrl.u32 %v88, 7
    %v90 = vsub.s32 %v87, %v89
    %v91 = vrot.slane %v77, %v90
    %v92 = vcombine.low %v84, %v91
    %v95 = vadd.f32 %v21, %v75
    %v96 = vadd.f32 %v22, %v92
    %v105 = vmul.f32 %v49, 2.0
    %v106 = vmul.f32 %v57, 2.0
    %v107 = vmul.f32 %v56, 2.0
    %v108 = vmul.f32 %v58, 2.0
    %v109 = vmul.f32 %v32, 2.0
    %v110 = vmul.f32 %v40, 2.0
    %v111 = vmul.f32 %v39, 2.0
    %v112 = vmul.f32 %v41, 2.0
    %v121 = vcombine.low %v105, %v106
    %v122 = vcombine.low %v107, %v108
    %v124 = vunpack.c.l.s4 1983009808
    %v125 = vunpack.c.0.s8 %v124
    %v126 = vlaneseq
    %v127 = vshrl.u32 %v126, 7
    %v128 = vsub.s32 %v125, %v127
    %v129 = vrot.slane %v121, %v128
    %v131 = vunpack.c.l.s4 1983009808
    %v132 = vunpack.c.0.s8 %v131
    %v133 = vlaneseq
    %v134 = vshrl.u32 %v133, 7
    %v135 = vsub.s32 %v132, %v134
    %v136 = vrot.slane %v122, %v135
    %v137 = vcombine.low %v129, %v136
    %v138 = vcombine.low %v109, %v110
    %v139 = vcombine.low %v111, %v112
    %v141 = vunpack.c.l.s4 1983009808
    %v142 = vunpack.c.0.s8 %v141
    %v143 = vlaneseq
    %v144 = vshrl.u32 %v143, 7
    %v145 = vsub.s32 %v142, %v144
    %v146 = vrot.slane %v138, %v145
    %v148 = vunpack.c.l.s4 1983009808
    %v149 = vunpack.c.0.s8 %v148
    %v150 = vlaneseq
    %v151 = vshrl.u32 %v150, 7
    %v152 = vsub.s32 %v149, %v151
    %v153 = vrot.slane %v139, %v152
    %v154 = vcombine.low %v146, %v153
    %v157 = vadd.f32 %v95, %v137
    %v158 = vadd.f32 %v96, %v154
    %v159 = vadd.f32 %v157, %v92
    %v160 = vadd.f32 %v158, %v75
    %v161 = vmul.f32 %v159, 0.2
    %v162 = vmul.f32 %v160, 0.2
    %163 = vst [vmem:[#allocation5] sm:$0xff] %v161
    %164 = vst [vmem:[#allocation5 + $0x8] sm:$0xff] %v162
    // Predicated region
    $region10: #{tpu_custom_call.1} parent=1 // pred_check
      _
    $region11: #{tpu_custom_call.1} parent=1 // pred_check_branch
      %166 = sbr.rel (0) target = $region13
    $region12: #{tpu_custom_call.1} parent=1 // pred_region
      %s168 = ssub.s32 256, 256
      %169 = vsyncadd [#allocation4], %s168
      %s171 = sshll.u32 [#allocation5], 4
      %s172 = int_to_ptr.vmem [resolvable:$true] %s171
      %174 = dma.vmem_to_hbm [thread:$0]  %s172, 256, %s1, [#allocation4]
    $region13: #{tpu_custom_call.1} parent=1 // pred_fallthru
      _
    // Predicated region
    $region14: #{tpu_custom_call.1} parent=1 // pred_check
      _
    $region15: #{tpu_custom_call.1} parent=1 // pred_check_branch
      %176 = sbr.rel (0) target = $region17
    $region16: #{tpu_custom_call.1} parent=1 // pred_region
      %177 = dma.done [#allocation4], 256
    $region17: #{tpu_custom_call.1} parent=1 // pred_fallthru
      _
    %178 = vsyncpa [#allocation3], 1
    %179 = vsyncpa [#allocation4], 1

</llo_original>
